<compile_context>
chip_gen: v7x
topology: tpu7x:2x2x1
jax: 0.10.0
libtpu: 0.0.40
codegen_flags: <defaults>
</compile_context>

<pallas_src>
import functools

import jax
import jax.numpy as jnp
from jax.experimental import pallas as pl
from jax.experimental.pallas import tpu as pltpu


def _elementwise_loss(logits, targets, mask):
    """Elementwise YOLOv3 objectness loss, f32 math, select-based masking.

    pos (mask==1): 5*(sigmoid(x)-t)^2 ; neg (mask==0): sigmoid(x)^2 ; else 0.
    Written as a single squared term: w * (inputs - t_eff)^2.
    """
    x = logits.astype(jnp.float32)
    inputs = jnp.clip(jax.nn.sigmoid(x), 1e-4, 1.0 - 1e-4)   # sigmoid -> EUP slot
    t = targets.astype(jnp.float32)
    m = mask.astype(jnp.float32)
    is_pos = m == 1.0
    is_neg = m == 0.0
    w = jnp.where(is_pos, 5.0, jnp.where(is_neg, 1.0, 0.0))
    d = inputs - jnp.where(is_pos, t, 0.0)
    return w * d * d


def _mse_mean_kernel(x_ref, t_ref, m_ref, out_ref, acc_ref, *,
                     inv_batch, tiled_axis, block_len, extent, mask_tail):
    j = pl.program_id(0)

    @pl.when(j == 0)
    def _():
        acc_ref[...] = jnp.zeros_like(acc_ref)

    # Elementwise accumulation stays on the VPU; cross-lane reduce deferred.
    loss = _elementwise_loss(x_ref[...], t_ref[...], m_ref[...])
    if mask_tail:
        # Final partial block: out-of-range elements hold garbage that could
        # compare equal to 0.0/1.0 -> zero them via an index mask.
        idx = j * block_len + jax.lax.broadcasted_iota(jnp.int32, loss.shape, tiled_axis)
        loss = jnp.where(idx < extent, loss, 0.0)
    acc_ref[...] += loss

    @pl.when(j == pl.num_programs(0) - 1)
    def _():
        out_ref[0, 0] = jnp.sum(acc_ref[...]) * inv_batch


def _mse_none_kernel(x_ref, t_ref, m_ref, out_ref):
    # Out-of-range lanes/rows of a partial last block are dropped by Pallas'
    # masked writeback, so no explicit tail handling is needed here.
    out_ref[...] = _elementwise_loss(x_ref[...], t_ref[...], m_ref[...])


def mse_loss(logits, targets, mask, reduction="mean", *,
             block_rows=2048, block_cols=4096):
    """Pallas implementation of MSELoss.forward (YOLOv3 confidence loss).

    logits, targets, mask: (B, N) arrays (pred_conf[:, :, 0] layout), any
    floating dtype; all math is f32 inside the kernel.
    """
    B, N = logits.shape
    T = B * N

    # ---- choose a free (reshape-only, no-copy) layout -----------------------
    if T % 128 == 0:
        # Flat sublane+lane dense layout: row-major view of (B, N) as (R, 128).
        R = T // 128
        shape2d = (R, 128)
        if R <= block_rows:
            block = (R, 128)                 # single full block (R%8 not required)
            grid = (1,)
            mask_tail = False
        else:
            br = max(8, (block_rows // 8) * 8)
            block = (br, 128)
            grid = (pl.cdiv(R, br),)
            mask_tail = (R % br) != 0
        tiled_axis, block_len, extent = 0, block[0], R

        def reshape_in(a):
            return a.reshape(shape2d)
    else:
        # Ragged fallback: keep (B, N), tile the lane axis.
        shape2d = (B, N)
        tc = max(128, (block_cols // 128) * 128)
        if N <= tc:
            block = (B, N)                   # single full block (N%128 not required)
            grid = (1,)
            mask_tail = False
        else:
            block = (B, tc)
            grid = (pl.cdiv(N, tc),)
            mask_tail = (N % tc) != 0
        tiled_axis, block_len, extent = 1, block[1], N

        def reshape_in(a):
            return a

    index_map = (lambda j: (j, 0)) if tiled_axis == 0 else (lambda j: (0, j))
    xs = (reshape_in(logits), reshape_in(targets), reshape_in(mask))
    in_specs = [pl.BlockSpec(block, index_map) for _ in range(3)]

    block_elems = block[0] * block[1]
    in_itembytes = sum(int(jnp.dtype(a.dtype).itemsize) for a in xs)
    in_bytes = T * in_itembytes
    # Double-buffered inputs; headroom added below per-path.
    vmem_inputs = 2 * block_elems * in_itembytes

    if reduction == "mean":
        # TODO(synk): on v7x, split the reduction across both TensorCores
        # (leading size-2 "parallel" axis producing per-core partial sums)
        # for very large N; a single "arbitrary" axis runs on one core.
        kernel = functools.partial(
            _mse_mean_kernel,
            inv_batch=float(1.0 / B),
            tiled_axis=tiled_axis,
            block_len=block_len,
            extent=extent,
            mask_tail=mask_tail,
        )
        vmem_limit = min(max(vmem_inputs + block_elems * 4 + (4 << 20), 16 << 20), 48 << 20)
        out = pl.pallas_call(
            kernel,
            out_shape=jax.ShapeDtypeStruct((1, 1), jnp.float32),
            grid=grid,
            in_specs=in_specs,
            out_specs=pl.BlockSpec(memory_space=pltpu.MemorySpace.SMEM),
            scratch_shapes=[pltpu.VMEM(block, jnp.float32)],
            compiler_params=pltpu.CompilerParams(
                dimension_semantics=("arbitrary",),
                vmem_limit_bytes=vmem_limit,
            ),
            cost_estimate=pl.CostEstimate(
                flops=10 * T, transcendentals=T, bytes_accessed=in_bytes + 4),
        )(*xs)
        return out[0, 0]
    else:
        vmem_limit = min(max(vmem_inputs + 2 * block_elems * 4 + (4 << 20), 16 << 20), 48 << 20)
        out = pl.pallas_call(
            _mse_none_kernel,
            out_shape=jax.ShapeDtypeStruct(shape2d, jnp.float32),
            grid=grid,
            in_specs=in_specs,
            out_specs=pl.BlockSpec(block, index_map),
            compiler_params=pltpu.CompilerParams(
                dimension_semantics=("parallel",),
                vmem_limit_bytes=vmem_limit,
            ),
            cost_estimate=pl.CostEstimate(
                flops=10 * T, transcendentals=T, bytes_accessed=in_bytes + T * 4),
        )(*xs)
        return out.reshape(B, N)   # free row-major reshape back to logical shape


def mse_loss_ref(logits, targets, mask, reduction="mean"):
    """Pure-JAX reference mirroring the PyTorch module exactly."""
    inputs = jnp.clip(jax.nn.sigmoid(logits.astype(jnp.float32)), 1e-4, 1.0 - 1e-4)
    t = targets.astype(jnp.float32)
    m = mask.astype(jnp.float32)
    pos_id = (m == 1.0).astype(jnp.float32)
    neg_id = (m == 0.0).astype(jnp.float32)
    loss = 5.0 * pos_id * (inputs - t) ** 2 + 1.0 * neg_id * inputs ** 2
    if reduction == "mean":
        return jnp.sum(loss) / jnp.float32(logits.shape[0])
    return loss


def _check(name, got, want, atol=1e-5, rtol=1e-5):
    assert jnp.allclose(got, want, rtol=rtol, atol=atol), (name, got, want)


if __name__ == "__main__":
    key = jax.random.PRNGKey(0)
    k1, k2, k3 = jax.random.split(key, 3)

    def make(B, N):
        logits = jax.random.normal(k1, (B, N), dtype=jnp.float32)
        targets = jax.random.uniform(k2, (B, N), dtype=jnp.float32)
        mask = (jax.random.uniform(k3, (B, N)) > 0.7).astype(jnp.float32)  # gt_obj is 0/1
        return logits, targets, mask

    # 1) 16x16 scale: (2, 256). B*N = 512 -> flat (4, 128) layout, one block.
    l, t, m = make(2, 16 * 16)
    _check("mean_256",
           jax.block_until_ready(mse_loss(l, t, m, reduction="mean")),
           mse_loss_ref(l, t, m, reduction="mean"))
    out_n = jax.block_until_ready(mse_loss(l, t, m, reduction="none"))
    assert out_n.shape == (2, 256)
    _check("none_256", out_n, mse_loss_ref(l, t, m, reduction="none"))

    # 2) 13x13 scale: (2, 169). B*N = 338 -> ragged fallback, one full block.
    l, t, m = make(2, 13 * 13)
    _check("mean_169",
           jax.block_until_ready(mse_loss(l, t, m, reduction="mean")),
           mse_loss_ref(l, t, m, reduction="mean"))
    out_n = jax.block_until_ready(mse_loss(l, t, m, reduction="none"))
    assert out_n.shape == (2, 169)
    _check("none_169", out_n, mse_loss_ref(l, t, m, reduction="none"))

    # 3) Flat multi-block grid with a partial tail block (exercises in-kernel
    #    row masking + Pallas masked writes): (2, 832) -> R=13 rows, block_rows=8.
    l, t, m = make(2, 832)
    _check("mean_flat_tail",
           jax.block_until_ready(mse_loss(l, t, m, reduction="mean", block_rows=8)),
           mse_loss_ref(l, t, m, reduction="mean"))
    out_n = jax.block_until_ready(mse_loss(l, t, m, reduction="none", block_rows=8))
    assert out_n.shape == (2, 832)
    _check("none_flat_tail", out_n, mse_loss_ref(l, t, m, reduction="none"))

    # 4) Ragged multi-block grid with a partial tail block (lane masking):
    #    (2, 300), block_cols=128 -> 3 grid steps.
    l, t, m = make(2, 300)
    _check("mean_ragged_tail",
           jax.block_until_ready(mse_loss(l, t, m, reduction="mean", block_cols=128)),
           mse_loss_ref(l, t, m, reduction="mean"))
    out_n = jax.block_until_ready(mse_loss(l, t, m, reduction="none", block_cols=128))
    assert out_n.shape == (2, 300)
    _check("none_ragged_tail", out_n, mse_loss_ref(l, t, m, reduction="none"))

    print("KERNEL_OK")
</pallas_src>

<mosaic_0001>
module attributes {stable_mosaic.version = 11 : i64} {
  func.func @_mse_mean_kernel(%arg0: i32, %arg1: memref<4x128xf32, #tpu.memory_space<vmem>>, %arg2: memref<4x128xf32, #tpu.memory_space<vmem>>, %arg3: memref<4x128xf32, #tpu.memory_space<vmem>>, %arg4: memref<1x1xf32, #tpu.memory_space<smem>>, %arg5: memref<4x128xf32, #tpu.memory_space<vmem>>) attributes {dimension_semantics = [#tpu.dimension_semantics<arbitrary>], iteration_bounds = array<i64: 1>, scalar_prefetch = 0 : i64, scratch_operands = 1 : i64, tpu.core_type = #tpu.core_type<tc>, window_params = [{transform_indices = @transform_0, window_bounds = array<i64: 4, 128>}, {transform_indices = @transform_1, window_bounds = array<i64: 4, 128>}, {transform_indices = @transform_2, window_bounds = array<i64: 4, 128>}, {transform_indices = @transform_3, window_bounds = array<i64: 1, 1>}]} {
    %c0_i32 = arith.constant 0 : i32
    %0 = arith.cmpi eq, %arg0, %c0_i32 : i32
    %1 = arith.extui %0 : i1 to i32
    %c0_i32_0 = arith.constant 0 : i32
    %2 = arith.cmpi ne, %1, %c0_i32_0 : i32
    scf.if %2 {
      %cst_20 = arith.constant 0.000000e+00 : f32
      %35 = vector.broadcast %cst_20 : f32 to vector<4x128xf32>
      %c0_21 = arith.constant 0 : index
      %c0_22 = arith.constant 0 : index
      %36 = vector.load %arg5[%c0_21, %c0_22] : memref<4x128xf32, #tpu.memory_space<vmem>>, vector<4x128xf32>
      tpu.vector_store %arg5[%c0_21, %c0_22], %35 {strides = array<i32>} : memref<4x128xf32, #tpu.memory_space<vmem>>, vector<4x128xf32>,
    } else {
    }
    %c0 = arith.constant 0 : index
    %c0_1 = arith.constant 0 : index
    %3 = vector.load %arg1[%c0, %c0_1] : memref<4x128xf32, #tpu.memory_space<vmem>>, vector<4x128xf32>
    %c0_2 = arith.constant 0 : index
    %c0_3 = arith.constant 0 : index
    %4 = vector.load %arg2[%c0_2, %c0_3] : memref<4x128xf32, #tpu.memory_space<vmem>>, vector<4x128xf32>
    %c0_4 = arith.constant 0 : index
    %c0_5 = arith.constant 0 : index
    %5 = vector.load %arg3[%c0_4, %c0_5] : memref<4x128xf32, #tpu.memory_space<vmem>>, vector<4x128xf32>
    %6 = arith.negf %3 : vector<4x128xf32>
    %7 = math.exp %6 : vector<4x128xf32>
    %cst = arith.constant 1.000000e+00 : f32
    %8 = vector.broadcast %cst : f32 to vector<4x128xf32>
    %9 = arith.addf %8, %7 : vector<4x128xf32>
    %10 = arith.divf %8, %9 : vector<4x128xf32>
    %cst_6 = arith.constant 9.99999974E-5 : f32
    %cst_7 = arith.constant 0.999899983 : f32
    %11 = vector.broadcast %cst_6 : f32 to vector<4x128xf32>
    %12 = arith.maximumf %11, %10 : vector<4x128xf32>
    %13 = vector.broadcast %cst_7 : f32 to vector<4x128xf32>
    %14 = arith.minimumf %13, %12 : vector<4x128xf32>
    %cst_8 = arith.constant 1.000000e+00 : f32
    %15 = vector.broadcast %cst_8 : f32 to vector<4x128xf32>
    %16 = arith.cmpf oeq, %5, %15 : vector<4x128xf32>
    %cst_9 = arith.constant 0.000000e+00 : f32
    %17 = vector.broadcast %cst_9 : f32 to vector<4x128xf32>
    %18 = arith.cmpf oeq, %5, %17 : vector<4x128xf32>
    %cst_10 = arith.constant 1.000000e+00 : f32
    %cst_11 = arith.constant 0.000000e+00 : f32
    %19 = vector.broadcast %cst_10 : f32 to vector<4x128xf32>
    %20 = vector.broadcast %cst_11 : f32 to vector<4x128xf32>
    %21 = arith.select %18, %19, %20 : vector<4x128xi1>, vector<4x128xf32>
    %cst_12 = arith.constant 5.000000e+00 : f32
    %22 = vector.broadcast %cst_12 : f32 to vector<4x128xf32>
    %23 = arith.select %16, %22, %21 : vector<4x128xi1>, vector<4x128xf32>
    %cst_13 = arith.constant 0.000000e+00 : f32
    %24 = vector.broadcast %cst_13 : f32 to vector<4x128xf32>
    %25 = arith.select %16, %4, %24 : vector<4x128xi1>, vector<4x128xf32>
    %26 = arith.subf %14, %25 : vector<4x128xf32>
    %27 = arith.mulf %23, %26 : vector<4x128xf32>
    %28 = arith.mulf %27, %26 : vector<4x128xf32>
    %c0_14 = arith.constant 0 : index
    %c0_15 = arith.constant 0 : index
    %29 = vector.load %arg5[%c0_14, %c0_15] : memref<4x128xf32, #tpu.memory_space<vmem>>, vector<4x128xf32>
    %30 = arith.addf %29, %28 : vector<4x128xf32>
    %c0_16 = arith.constant 0 : index
    %c0_17 = arith.constant 0 : index
    %31 = vector.load %arg5[%c0_16, %c0_17] : memref<4x128xf32, #tpu.memory_space<vmem>>, vector<4x128xf32>
    tpu.vector_store %arg5[%c0_16, %c0_17], %30 {strides = array<i32>} : memref<4x128xf32, #tpu.memory_space<vmem>>, vector<4x128xf32>,
    %c0_i32_18 = arith.constant 0 : i32
    %32 = arith.cmpi eq, %arg0, %c0_i32_18 : i32
    %33 = arith.extui %32 : i1 to i32
    %c0_i32_19 = arith.constant 0 : i32
    %34 = arith.cmpi ne, %33, %c0_i32_19 : i32
    scf.if %34 {
      %c0_20 = arith.constant 0 : index
      %c0_21 = arith.constant 0 : index
      %35 = vector.load %arg5[%c0_20, %c0_21] : memref<4x128xf32, #tpu.memory_space<vmem>>, vector<4x128xf32>
      %36 = vector.shape_cast %35 : vector<4x128xf32> to vector<1x4x128xf32>
      %cst_22 = arith.constant dense<0.000000e+00> : vector<1xf32>
      %37 = vector.multi_reduction <add>, %36, %cst_22 [1, 2] : vector<1x4x128xf32> to vector<1xf32>
      %38 = vector.shape_cast %37 : vector<1xf32> to vector<1x1x1xf32>
      %39 = vector.extract %38[0, 0, 0] : f32 from vector<1x1x1xf32>
      %cst_23 = arith.constant 5.000000e-01 : f32
      %40 = arith.mulf %39, %cst_23 : f32
      %c0_24 = arith.constant 0 : index
      %c0_25 = arith.constant 0 : index
      %41 = memref.load %arg4[%c0_24, %c0_25] : memref<1x1xf32, #tpu.memory_space<smem>>
      memref.store %40, %arg4[%c0_24, %c0_25] : memref<1x1xf32, #tpu.memory_space<smem>>
    } else {
    }
    return
  }
  func.func @transform_0(%arg0: i32) -> (i32, i32) {
    %c0_i32 = arith.constant 0 : i32
    %c0_i32_0 = arith.constant 0 : i32
    return %arg0, %c0_i32 : i32, i32
  }
  func.func @transform_1(%arg0: i32) -> (i32, i32) {
    %c0_i32 = arith.constant 0 : i32
    %c0_i32_0 = arith.constant 0 : i32
    return %arg0, %c0_i32 : i32, i32
  }
  func.func @transform_2(%arg0: i32) -> (i32, i32) {
    %c0_i32 = arith.constant 0 : i32
    %c0_i32_0 = arith.constant 0 : i32
    return %arg0, %c0_i32 : i32, i32
  }
  func.func @transform_3(%arg0: i32) -> (i32, i32) {
    %c0_i32 = arith.constant 0 : i32
    %c0_i32_0 = arith.constant 0 : i32
    %c0_i32_1 = arith.constant 0 : i32
    return %c0_i32, %c0_i32_0 : i32, i32
  }
}

</mosaic_0001>

<llo_original>
// kernel: tpu_custom_call.1
$region0: #{tpu_custom_call.1}
  #allocation0 [shape = 'u32[]', space=smem, size = 0x4, offset = 0x4, fixed_abs, tag = 'smem constant byte address 0x4 - core index']
  #allocation1 [shape = 'u32[144,128]{1,0:T(1,128)}', space=vmem, size = 0x12000, scoped, tag = 'internal scratch']
  #allocation2 [shape = 'f32[4,128]{1,0:T(4,128)}', space=vmem, size = 0x800, scoped, tag = 'scratch operand']
  %s0 = inlined_call_operand.hbm [shape: f32[4,128], index: 0, kind: input, shape index: {}]
  %s1 = inlined_call_operand.hbm [shape: f32[4,128], index: 1, kind: input, shape index: {}]
  %s2 = inlined_call_operand.vmem [shape: f32[4,128], index: 2, kind: input, shape index: {}]
  %s3 = inlined_call_operand.hbm [shape: f32[1,1], index: 3, kind: output, shape index: {}]
  %s4 = sld [smem:[#allocation0]]
  $region38: #{tpu_custom_call.1} parent=0
    _
  %s6 = ssub.s32 1, %s4
  %s7 = scalar_select 0, %s6, %s4
  $region1: #{tpu_custom_call.1} parent=0
    #allocation3 [shape = 'u8[2048]{0}', space=vmem, size = 0x800, scoped, tag = 'input window, operand 0, single buffered']
    #allocation4 [shape = 's32[1]{0}', space=sflag, size = 0x4, scoped, tag = 'scoped memory for tpu_custom_call.1']
    #allocation5 [shape = 's32[1]{0}', space=sflag, size = 0x4, scoped, tag = 'scoped memory for tpu_custom_call.1']
    #allocation6 [shape = 'u8[2048]{0}', space=vmem, size = 0x800, scoped, tag = 'input window, operand 1, single buffered']
    #allocation7 [shape = 's32[1]{0}', space=sflag, size = 0x4, scoped, tag = 'scoped memory for tpu_custom_call.1']
    #allocation8 [shape = 'u8[512]{0}', space=smem, size = 0x200, scoped, tag = 'output window, operand 0, single buffered']
    %8 = vsyncpa [#allocation4], 0
    %9 = vsyncpa [#allocation7], 0
    %10 = vsyncpa [#allocation5], 0
    // Predicated region
    $region2: #{tpu_custom_call.1} parent=1 // pred_check
      _
    $region3: #{tpu_custom_call.1} parent=1 // pred_check_branch
      %12 = sbr.rel (0) target = $region5
    $region4: #{tpu_custom_call.1} parent=1 // pred_region
      %s14 = ssub.s32 64, 64
      %15 = vsyncadd [#allocation4], %s14
      %s17 = sshll.u32 [#allocation3], 4
      %s18 = int_to_ptr.vmem [resolvable:$true] %s17
      %20 = dma.hbm_to_vmem [thread:$0]  %s0, 64, %s18, [#allocation4]
    $region5: #{tpu_custom_call.1} parent=1 // pred_fallthru
      _
    // Predicated region
    $region6: #{tpu_custom_call.1} parent=1 // pred_check
      _
    $region7: #{tpu_custom_call.1} parent=1 // pred_check_branch
      %22 = sbr.rel (0) target = $region9
    $region8: #{tpu_custom_call.1} parent=1 // pred_region
      %s24 = ssub.s32 64, 64
      %25 = vsyncadd [#allocation7], %s24
      %s27 = sshll.u32 [#allocation6], 4
      %s28 = int_to_ptr.vmem [resolvable:$true] %s27
      %30 = dma.hbm_to_vmem [thread:$0]  %s1, 64, %s28, [#allocation7]
    $region9: #{tpu_custom_call.1} parent=1 // pred_fallthru
      _
    // Predicated region
    $region10: #{tpu_custom_call.1} parent=1 // pred_check
      _
    $region11: #{tpu_custom_call.1} parent=1 // pred_check_branch
      %32 = sbr.rel (0) target = $region13
    $region12: #{tpu_custom_call.1} parent=1 // pred_region
      _
    $region13: #{tpu_custom_call.1} parent=1 // pred_fallthru
      _
    // Predicated region
    $region14: #{tpu_custom_call.1} parent=1 // pred_check
      _
    $region15: #{tpu_custom_call.1} parent=1 // pred_check_branch
      %34 = sbr.rel (0) target = $region17
    $region16: #{tpu_custom_call.1} parent=1 // pred_region
      %35 = dma.done [#allocation4], 64
    $region17: #{tpu_custom_call.1} parent=1 // pred_fallthru
      _
    // Predicated region
    $region18: #{tpu_custom_call.1} parent=1 // pred_check
      _
    $region19: #{tpu_custom_call.1} parent=1 // pred_check_branch
      %37 = sbr.rel (0) target = $region21
    $region20: #{tpu_custom_call.1} parent=1 // pred_region
      %38 = dma.done [#allocation7], 64
    $region21: #{tpu_custom_call.1} parent=1 // pred_fallthru
      _
    %p39 = scmp.eq.s32.totalorder 0, 0
    // Predicated region
    $region22: #{tpu_custom_call.1} parent=1 // pred_check
      %p40 = pneg %p39
    $region23: #{tpu_custom_call.1} parent=1 // pred_check_branch
      %42 = sbr.rel (%p40) target = $region25
    $region24: #{tpu_custom_call.1} parent=1 // pred_region
      %43 = vst [vmem:[#allocation2] sm:$0xf] 0.0
    $region25: #{tpu_custom_call.1} parent=1 // pred_fallthru
      _
    %v44 = vld [vmem:[#allocation3] sm:$0xf]
    %v45 = vld [vmem:[#allocation6] sm:$0xf]
    %v46 = vld [vmem:[%s2] sm:$0xf]
    %v47 = vxor.u32 %v44, 2147483648
    %v48 = vmul.f32 %v47, 1.442695
    %v49 = vpow.pop %v48
    %v50 = vadd.f32 %v49, 1.0
    %v51 = vrcp.pop %v50
    %v52 = vmul.f32 1.0, %v51
    %v53 = vmax.f32 %v52, 0.0001
    %v54 = vmin.f32 %v53, 0.9999
    %vm55 = vcmp.eq.f32.partialorder %v46, 1.0
    %vm56 = vcmp.eq.f32.partialorder %v46, 0.0
    %v57 = vsel %vm56, 1.0, 0.0
    %v58 = vsel %vm55, 5.0, %v57
    %v59 = vsel %vm55, %v45, 0.0
    %v60 = vsub.f32 %v54, %v59
    %v61 = vmul.f32 %v58, %v60
    %v62 = vmul.f32 %v61, %v60
    %v63 = vld [vmem:[#allocation2] sm:$0xf]
    %v64 = vadd.f32 %v63, %v62
    %65 = vst [vmem:[#allocation2] sm:$0xf] %v64
    // Predicated region
    $region26: #{tpu_custom_call.1} parent=1 // pred_check
      %p66 = pneg %p39
    $region27: #{tpu_custom_call.1} parent=1 // pred_check_branch
      %68 = sbr.rel (%p66) target = $region29
    $region28: #{tpu_custom_call.1} parent=1 // pred_region
      %v69 = vld [vmem:[#allocation2] sm:$0xf]
      %vm70 = vcmask 1043456
      %v71 = vsel %vm70, %v69, 0.0
      %72 = vadd.xlane.f32.xlu0 %v71
      %v73 = vpop.xlane.xlu0 %72
      %v74 = vrot.slane %v73, 4
      %v75 = vadd.f32 %v73, %v74
      %v76 = vrot.slane %v75, 2
      %v77 = vadd.f32 %v75, %v76
      %v78 = vrot.slane %v77, 1
      %v79 = vadd.f32 %v77, %v78
      %s80 = vtos %v79
      %s81 = smul.f32 %s80, 0.5
      %s82 = scalar_lea.smem [#allocation8], 0
      %83 = sst [smem:[%s82]] %s81
    $region29: #{tpu_custom_call.1} parent=1 // pred_fallthru
      _
    // Predicated region
    $region30: #{tpu_custom_call.1} parent=1 // pred_check
      _
    $region31: #{tpu_custom_call.1} parent=1 // pred_check_branch
      %85 = sbr.rel (0) target = $region33
    $region32: #{tpu_custom_call.1} parent=1 // pred_region
      %s87 = ssub.s32 16, 16
      %88 = vsyncadd [#allocation5], %s87
      %91 = dma.smem_to_hbm [#allocation8], 16, %s3, [#allocation5]
    $region33: #{tpu_custom_call.1} parent=1 // pred_fallthru
      _
    // Predicated region
    $region34: #{tpu_custom_call.1} parent=1 // pred_check
      _
    $region35: #{tpu_custom_call.1} parent=1 // pred_check_branch
      %93 = sbr.rel (0) target = $region37
    $region36: #{tpu_custom_call.1} parent=1 // pred_region
      %94 = dma.done [#allocation5], 16
    $region37: #{tpu_custom_call.1} parent=1 // pred_fallthru
      _
    %95 = sfence
    %96 = vsyncpa [#allocation4], 1
    %97 = vsyncpa [#allocation7], 1
    %98 = vsyncpa [#allocation5], 1

</llo_original>
